<compile_context>
chip_gen: v6e
topology: v6e:2x2x1
jax: 0.10.0
libtpu: 0.0.40
codegen_flags: <defaults>
</compile_context>

<pallas_src>
import functools

import jax
import jax.numpy as jnp
from jax import lax
from jax.experimental import pallas as pl
from jax.experimental.pallas import tpu as pltpu

EPS = 1e-5


def _round_up(x, m):
    return (x + m - 1) // m * m


# -----------------------------------------------------------------------------
# Fused kernel: grid = (2 phases, M tiles).
#   phase 0: conv + per-channel sum / sumsq accumulation, finalize scale/shift.
#   phase 1: conv recompute + y*scale + shift, lane-dense store.
# -----------------------------------------------------------------------------
def _fused_bn_conv_kernel(w_ref, p_ref, g_ref, b_ref, o_ref,
                          scale_ref, shift_ref, *, inv_m):
    # w_ref:     (Cp, Kp)      conv weight, resident
    # p_ref:     (Kp, TM)      im2col patches^T tile (M on the lane axis)
    # g_ref:     (Cp, 1)       gamma
    # b_ref:     (Cp, 1)       beta
    # o_ref:     (Cp, TM)      normalized output tile
    # scale_ref: (Cp, 1) VMEM  running sum   -> BN scale after finalize
    # shift_ref: (Cp, 1) VMEM  running sumsq -> BN shift after finalize
    phase = pl.program_id(0)
    i = pl.program_id(1)

    @pl.when(jnp.logical_and(phase == 0, i == 0))
    def _init():
        scale_ref[...] = jnp.zeros_like(scale_ref)
        shift_ref[...] = jnp.zeros_like(shift_ref)

    # (Cp, Kp) @ (Kp, TM) -> (Cp, TM) on the MXU, f32 accumulate.
    y = jnp.dot(w_ref[...], p_ref[...], preferred_element_type=jnp.float32)

    @pl.when(phase == 0)
    def _accumulate():
        # Padded M lanes are zero -> contribute nothing; true M is divided out below.
        scale_ref[...] += jnp.sum(y, axis=1, keepdims=True)        # sum(y)
        shift_ref[...] += jnp.sum(y * y, axis=1, keepdims=True)    # sum(y*y)

    @pl.when(jnp.logical_and(phase == 0, i == pl.num_programs(1) - 1))
    def _finalize():
        # Fold statistics into (scale, shift) exactly once so phase 1 is a pure FMA.
        mean = scale_ref[...] * inv_m
        var = jnp.maximum(shift_ref[...] * inv_m - mean * mean, 0.0)
        inv_std = lax.rsqrt(var + EPS)
        scale = g_ref[...] * inv_std
        shift = b_ref[...] - mean * scale
        scale_ref[...] = scale
        shift_ref[...] = shift

    @pl.when(phase == 1)
    def _apply():
        o_ref[...] = (y * scale_ref[...] + shift_ref[...]).astype(o_ref.dtype)


# -----------------------------------------------------------------------------
# Host-side transposed im2col (plain-JAX glue).
# -----------------------------------------------------------------------------
def _im2col_t(x, kh, kw, stride, padding):
    """x: (N, Cin, H, W) -> patches^T (Cin*kh*kw, N*OH*OW).

    K ordered (Cin, kh, kw) to match weight.reshape(Cout, Cin*kh*kw);
    M ordered (N, OH, OW).
    """
    n, cin, h, w = x.shape
    oh = (h + 2 * padding - kh) // stride + 1
    ow = (w + 2 * padding - kw) // stride + 1
    xp = jnp.pad(x, ((0, 0), (0, 0), (padding, padding), (padding, padding)))
    cols = []
    for i in range(kh):
        for j in range(kw):
            cols.append(xp[:, :, i:i + stride * oh:stride, j:j + stride * ow:stride])
    cols = jnp.stack(cols, axis=2)               # (N, Cin, kh*kw, OH, OW)
    cols = jnp.transpose(cols, (1, 2, 0, 3, 4))  # (Cin, kh*kw, N, OH, OW)
    return cols.reshape(cin * kh * kw, n * oh * ow), (n, oh, ow)


def bn_conv2d_forward(x, weight, gamma, beta, stride=1, padding=0,
                      tile_m=1024, mxu_dtype=jnp.bfloat16, out_dtype=jnp.float32):
    """x: (N, Cin, H, W), weight: (Cout, Cin, kh, kw), gamma/beta: (Cout,)."""
    cout, cin, kh, kw = weight.shape
    patches_t, (n, oh, ow) = _im2col_t(x, kh, kw, stride, padding)   # (K, M)
    k, m = patches_t.shape

    sub = 16 if jnp.dtype(mxu_dtype).itemsize < 4 else 8
    kp = _round_up(k, sub)                 # mild sublane pad only (36 -> 40/48)
    cp = _round_up(cout, sub)              # channels pad only to a sublane multiple
    tile_m = max(128, min(_round_up(tile_m, 128), _round_up(m, 128)))
    mp = _round_up(m, tile_m)              # lane-axis pad; zero columns are inert
    grid_m = mp // tile_m

    w2 = jnp.pad(weight.reshape(cout, k).astype(mxu_dtype),
                 ((0, cp - cout), (0, kp - k)))
    p2 = jnp.pad(patches_t.astype(mxu_dtype), ((0, kp - k), (0, mp - m)))
    g2 = jnp.pad(gamma.astype(jnp.float32).reshape(cout, 1), ((0, cp - cout), (0, 0)))
    b2 = jnp.pad(beta.astype(jnp.float32).reshape(cout, 1), ((0, cp - cout), (0, 0)))

    itemsize = jnp.dtype(mxu_dtype).itemsize
    kernel = functools.partial(_fused_bn_conv_kernel, inv_m=1.0 / float(m))

    out_flat = pl.pallas_call(
        kernel,
        out_shape=jax.ShapeDtypeStruct((cp, mp), out_dtype),
        grid=(2, grid_m),                                        # (phase, M tiles)
        in_specs=[
            pl.BlockSpec((cp, kp), lambda p, i: (0, 0)),         # weights (resident)
            pl.BlockSpec((kp, tile_m), lambda p, i: (0, i)),     # patches^T tile
            pl.BlockSpec((cp, 1), lambda p, i: (0, 0)),          # gamma (resident)
            pl.BlockSpec((cp, 1), lambda p, i: (0, 0)),          # beta  (resident)
        ],
        # Pin the output block to 0 during phase 0 (i*p == 0) so the pipeline never
        # flushes an unwritten block; phase 1 then writes/flushes each block once.
        out_specs=pl.BlockSpec((cp, tile_m), lambda p, i: (0, i * p)),
        scratch_shapes=[pltpu.VMEM((cp, 1), jnp.float32),        # sum   -> scale
                        pltpu.VMEM((cp, 1), jnp.float32)],       # sumsq -> shift
        compiler_params=pltpu.CompilerParams(
            dimension_semantics=("arbitrary", "arbitrary")),     # sequential phases
        cost_estimate=pl.CostEstimate(
            flops=2 * 2 * cp * kp * mp,                          # conv done twice
            transcendentals=0,
            bytes_accessed=2 * kp * mp * itemsize + cp * kp * itemsize
                           + cp * mp * jnp.dtype(out_dtype).itemsize),
    )(w2, p2, g2, b2)

    # (Cp, Mp) -> (Cout, N, OH, OW) -> NCHW (tiny host-side relayout to match the
    # PyTorch module's output layout).
    out = out_flat[:cout, :m].reshape(cout, n, oh, ow)
    return jnp.transpose(out, (1, 0, 2, 3)).astype(out_dtype)


def _reference(x, weight, gamma, beta, stride, padding):
    y = lax.conv_general_dilated(
        x, weight,
        window_strides=(stride, stride),
        padding=((padding, padding), (padding, padding)),
        dimension_numbers=("NCHW", "OIHW", "NCHW"),
    )
    mean = jnp.mean(y, axis=(0, 2, 3), keepdims=True)
    var = jnp.mean((y - mean) ** 2, axis=(0, 2, 3), keepdims=True)
    g = gamma.reshape(1, -1, 1, 1)
    b = beta.reshape(1, -1, 1, 1)
    return (y - mean) * lax.rsqrt(var + EPS) * g + b


if __name__ == "__main__":
    # Module config: bn_conv2d(in_channels=4, out_channels=8, kernel_size=3,
    #                          stride=1, padding=1)
    N, Cin, H, W = 2, 4, 16, 16
    Cout, KH, KW = 8, 3, 3
    stride, padding = 1, 1

    key = jax.random.PRNGKey(0)
    kx, kw_, kg, kb = jax.random.split(key, 4)
    x = jax.random.normal(kx, (N, Cin, H, W), dtype=jnp.float32)
    fan_in = Cin * KH * KW
    weight = jax.random.uniform(kw_, (Cout, Cin, KH, KW), jnp.float32,
                                -1.0 / jnp.sqrt(fan_in), 1.0 / jnp.sqrt(fan_in))
    gamma = 1.0 + 0.05 * jax.random.normal(kg, (Cout,), jnp.float32)
    beta = 0.05 * jax.random.normal(kb, (Cout,), jnp.float32)

    ref = _reference(x, weight, gamma, beta, stride, padding)

    # f32 MXU-input path: tight numerical check against the XLA conv+BN reference.
    out_f32 = bn_conv2d_forward(x, weight, gamma, beta, stride=stride,
                                padding=padding, mxu_dtype=jnp.float32)
    out_f32 = jax.block_until_ready(out_f32)
    assert out_f32.shape == (N, Cout, H, W), out_f32.shape
    assert jnp.allclose(out_f32, ref, rtol=1e-4, atol=1e-4), \
        float(jnp.max(jnp.abs(out_f32 - ref)))

    # Default bf16 MXU-input path (fast path on v5e/v6e/v7x): looser check.
    out_bf16 = bn_conv2d_forward(x, weight, gamma, beta, stride=stride,
                                 padding=padding)
    out_bf16 = jax.block_until_ready(out_bf16)
    assert out_bf16.shape == (N, Cout, H, W), out_bf16.shape
    assert jnp.allclose(out_bf16, ref, rtol=5e-2, atol=5e-2), \
        float(jnp.max(jnp.abs(out_bf16 - ref)))

    print("KERNEL_OK")
</pallas_src>

<mosaic_0001>
module attributes {stable_mosaic.version = 11 : i64} {
  func.func @_fused_bn_conv_kernel(%arg0: i32, %arg1: i32, %arg2: memref<8x40xf32, #tpu.memory_space<vmem>>, %arg3: memref<40x512xf32, #tpu.memory_space<vmem>>, %arg4: memref<8x1xf32, #tpu.memory_space<vmem>>, %arg5: memref<8x1xf32, #tpu.memory_space<vmem>>, %arg6: memref<8x512xf32, #tpu.memory_space<vmem>>, %arg7: memref<8x1xf32, #tpu.memory_space<vmem>>, %arg8: memref<8x1xf32, #tpu.memory_space<vmem>>) attributes {dimension_semantics = [#tpu.dimension_semantics<arbitrary>, #tpu.dimension_semantics<arbitrary>], iteration_bounds = array<i64: 2, 1>, scalar_prefetch = 0 : i64, scratch_operands = 2 : i64, tpu.core_type = #tpu.core_type<tc>, window_params = [{pipeline_mode = #tpu.pipeline_mode<synchronous>, transform_indices = @transform_0, window_bounds = array<i64: 8, 40>}, {transform_indices = @transform_1, window_bounds = array<i64: 40, 512>}, {pipeline_mode = #tpu.pipeline_mode<synchronous>, transform_indices = @transform_2, window_bounds = array<i64: 8, 1>}, {pipeline_mode = #tpu.pipeline_mode<synchronous>, transform_indices = @transform_3, window_bounds = array<i64: 8, 1>}, {transform_indices = @transform_4, window_bounds = array<i64: 8, 512>}]} {
    %c0_i32 = arith.constant 0 : i32
    %0 = arith.cmpi eq, %arg0, %c0_i32 : i32
    %c0_i32_0 = arith.constant 0 : i32
    %1 = arith.cmpi eq, %arg1, %c0_i32_0 : i32
    %2 = arith.andi %0, %1 : i1
    %3 = arith.extui %2 : i1 to i32
    %c0_i32_1 = arith.constant 0 : i32
    %4 = arith.cmpi ne, %3, %c0_i32_1 : i32
    scf.if %4 {
      %cst_11 = arith.constant 0.000000e+00 : f32
      %19 = vector.broadcast %cst_11 : f32 to vector<8x1xf32>
      %c0_12 = arith.constant 0 : index
      %c0_13 = arith.constant 0 : index
      %20 = vector.load %arg7[%c0_12, %c0_13] : memref<8x1xf32, #tpu.memory_space<vmem>>, vector<8x1xf32>
      tpu.vector_store %arg7[%c0_12, %c0_13], %19 {strides = array<i32>} : memref<8x1xf32, #tpu.memory_space<vmem>>, vector<8x1xf32>,
      %cst_14 = arith.constant 0.000000e+00 : f32
      %21 = vector.broadcast %cst_14 : f32 to vector<8x1xf32>
      %c0_15 = arith.constant 0 : index
      %c0_16 = arith.constant 0 : index
      %22 = vector.load %arg8[%c0_15, %c0_16] : memref<8x1xf32, #tpu.memory_space<vmem>>, vector<8x1xf32>
      tpu.vector_store %arg8[%c0_15, %c0_16], %21 {strides = array<i32>} : memref<8x1xf32, #tpu.memory_space<vmem>>, vector<8x1xf32>,
    } else {
    }
    %c0 = arith.constant 0 : index
    %c0_2 = arith.constant 0 : index
    %5 = vector.load %arg2[%c0, %c0_2] : memref<8x40xf32, #tpu.memory_space<vmem>>, vector<8x40xf32>
    %c0_3 = arith.constant 0 : index
    %c0_4 = arith.constant 0 : index
    %6 = vector.load %arg3[%c0_3, %c0_4] : memref<40x512xf32, #tpu.memory_space<vmem>>, vector<40x512xf32>
    %cst = arith.constant dense<0.000000e+00> : vector<8x512xf32>
    %7 = tpu.matmul %5, %6, %cst {dimension_numbers = #tpu.dot_dimension_numbers<[1], [0], [0], [1], [0, 0, 1, 1], [], []>} : vector<8x40xf32>, vector<40x512xf32>, vector<8x512xf32> -> vector<8x512xf32>
    %c0_i32_5 = arith.constant 0 : i32
    %8 = arith.cmpi eq, %arg0, %c0_i32_5 : i32
    %9 = arith.extui %8 : i1 to i32
    %c0_i32_6 = arith.constant 0 : i32
    %10 = arith.cmpi ne, %9, %c0_i32_6 : i32
    scf.if %10 {
      %c0_11 = arith.constant 0 : index
      %c0_12 = arith.constant 0 : index
      %19 = vector.load %arg7[%c0_11, %c0_12] : memref<8x1xf32, #tpu.memory_space<vmem>>, vector<8x1xf32>
      %cst_13 = arith.constant dense<0.000000e+00> : vector<8xf32>
      %20 = vector.multi_reduction <add>, %7, %cst_13 [1] : vector<8x512xf32> to vector<8xf32>
      %21 = vector.shape_cast %20 : vector<8xf32> to vector<8x1xf32>
      %22 = arith.addf %19, %21 : vector<8x1xf32>
      %c0_14 = arith.constant 0 : index
      %c0_15 = arith.constant 0 : index
      %23 = vector.load %arg7[%c0_14, %c0_15] : memref<8x1xf32, #tpu.memory_space<vmem>>, vector<8x1xf32>
      tpu.vector_store %arg7[%c0_14, %c0_15], %22 {strides = array<i32>} : memref<8x1xf32, #tpu.memory_space<vmem>>, vector<8x1xf32>,
      %c0_16 = arith.constant 0 : index
      %c0_17 = arith.constant 0 : index
      %24 = vector.load %arg8[%c0_16, %c0_17] : memref<8x1xf32, #tpu.memory_space<vmem>>, vector<8x1xf32>
      %25 = arith.mulf %7, %7 : vector<8x512xf32>
      %cst_18 = arith.constant dense<0.000000e+00> : vector<8xf32>
      %26 = vector.multi_reduction <add>, %25, %cst_18 [1] : vector<8x512xf32> to vector<8xf32>
      %27 = vector.shape_cast %26 : vector<8xf32> to vector<8x1xf32>
      %28 = arith.addf %24, %27 : vector<8x1xf32>
      %c0_19 = arith.constant 0 : index
      %c0_20 = arith.constant 0 : index
      %29 = vector.load %arg8[%c0_19, %c0_20] : memref<8x1xf32, #tpu.memory_space<vmem>>, vector<8x1xf32>
      tpu.vector_store %arg8[%c0_19, %c0_20], %28 {strides = array<i32>} : memref<8x1xf32, #tpu.memory_space<vmem>>, vector<8x1xf32>,
    } else {
    }
    %c0_i32_7 = arith.constant 0 : i32
    %11 = arith.cmpi eq, %arg0, %c0_i32_7 : i32
    %c0_i32_8 = arith.constant 0 : i32
    %12 = arith.cmpi eq, %arg1, %c0_i32_8 : i32
    %13 = arith.andi %11, %12 : i1
    %14 = arith.extui %13 : i1 to i32
    %c0_i32_9 = arith.constant 0 : i32
    %15 = arith.cmpi ne, %14, %c0_i32_9 : i32
    scf.if %15 {
      %c0_11 = arith.constant 0 : index
      %c0_12 = arith.constant 0 : index
      %19 = vector.load %arg7[%c0_11, %c0_12] : memref<8x1xf32, #tpu.memory_space<vmem>>, vector<8x1xf32>
      %cst_13 = arith.constant 0.001953125 : f32
      %20 = vector.broadcast %cst_13 : f32 to vector<8x1xf32>
      %21 = arith.mulf %19, %20 : vector<8x1xf32>
      %c0_14 = arith.constant 0 : index
      %c0_15 = arith.constant 0 : index
      %22 = vector.load %arg8[%c0_14, %c0_15] : memref<8x1xf32, #tpu.memory_space<vmem>>, vector<8x1xf32>
      %cst_16 = arith.constant 0.001953125 : f32
      %23 = vector.broadcast %cst_16 : f32 to vector<8x1xf32>
      %24 = arith.mulf %22, %23 : vector<8x1xf32>
      %25 = arith.mulf %21, %21 : vector<8x1xf32>
      %26 = arith.subf %24, %25 : vector<8x1xf32>
      %cst_17 = arith.constant 0.000000e+00 : f32
      %27 = vector.broadcast %cst_17 : f32 to vector<8x1xf32>
      %28 = arith.maximumf %26, %27 : vector<8x1xf32>
      %cst_18 = arith.constant 9.99999974E-6 : f32
      %29 = vector.broadcast %cst_18 : f32 to vector<8x1xf32>
      %30 = arith.addf %28, %29 : vector<8x1xf32>
      %31 = math.rsqrt %30 : vector<8x1xf32>
      %c0_19 = arith.constant 0 : index
      %c0_20 = arith.constant 0 : index
      %32 = vector.load %arg4[%c0_19, %c0_20] : memref<8x1xf32, #tpu.memory_space<vmem>>, vector<8x1xf32>
      %33 = arith.mulf %32, %31 : vector<8x1xf32>
      %c0_21 = arith.constant 0 : index
      %c0_22 = arith.constant 0 : index
      %34 = vector.load %arg5[%c0_21, %c0_22] : memref<8x1xf32, #tpu.memory_space<vmem>>, vector<8x1xf32>
      %35 = arith.mulf %21, %33 : vector<8x1xf32>
      %36 = arith.subf %34, %35 : vector<8x1xf32>
      %c0_23 = arith.constant 0 : index
      %c0_24 = arith.constant 0 : index
      %37 = vector.load %arg7[%c0_23, %c0_24] : memref<8x1xf32, #tpu.memory_space<vmem>>, vector<8x1xf32>
      tpu.vector_store %arg7[%c0_23, %c0_24], %33 {strides = array<i32>} : memref<8x1xf32, #tpu.memory_space<vmem>>, vector<8x1xf32>,
      %c0_25 = arith.constant 0 : index
      %c0_26 = arith.constant 0 : index
      %38 = vector.load %arg8[%c0_25, %c0_26] : memref<8x1xf32, #tpu.memory_space<vmem>>, vector<8x1xf32>
      tpu.vector_store %arg8[%c0_25, %c0_26], %36 {strides = array<i32>} : memref<8x1xf32, #tpu.memory_space<vmem>>, vector<8x1xf32>,
    } else {
    }
    %c1_i32 = arith.constant 1 : i32
    %16 = arith.cmpi eq, %arg0, %c1_i32 : i32
    %17 = arith.extui %16 : i1 to i32
    %c0_i32_10 = arith.constant 0 : i32
    %18 = arith.cmpi ne, %17, %c0_i32_10 : i32
    scf.if %18 {
      %c0_11 = arith.constant 0 : index
      %c0_12 = arith.constant 0 : index
      %19 = vector.load %arg7[%c0_11, %c0_12] : memref<8x1xf32, #tpu.memory_space<vmem>>, vector<8x1xf32>
      %20 = vector.broadcast %19 : vector<8x1xf32> to vector<8x512xf32>
      %21 = arith.mulf %7, %20 : vector<8x512xf32>
      %c0_13 = arith.constant 0 : index
      %c0_14 = arith.constant 0 : index
      %22 = vector.load %arg8[%c0_13, %c0_14] : memref<8x1xf32, #tpu.memory_space<vmem>>, vector<8x1xf32>
      %23 = vector.broadcast %22 : vector<8x1xf32> to vector<8x512xf32>
      %24 = arith.addf %21, %23 : vector<8x512xf32>
      %c0_15 = arith.constant 0 : index
      %c0_16 = arith.constant 0 : index
      %25 = vector.load %arg6[%c0_15, %c0_16] : memref<8x512xf32, #tpu.memory_space<vmem>>, vector<8x512xf32>
      tpu.vector_store %arg6[%c0_15, %c0_16], %24 {strides = array<i32>} : memref<8x512xf32, #tpu.memory_space<vmem>>, vector<8x512xf32>,
    } else {
    }
    return
  }
  func.func @transform_0(%arg0: i32, %arg1: i32) -> (i32, i32) {
    %c0_i32 = arith.constant 0 : i32
    %c0_i32_0 = arith.constant 0 : i32
    %c0_i32_1 = arith.constant 0 : i32
    return %c0_i32, %c0_i32_0 : i32, i32
  }
  func.func @transform_1(%arg0: i32, %arg1: i32) -> (i32, i32) {
    %c0_i32 = arith.constant 0 : i32
    %c0_i32_0 = arith.constant 0 : i32
    return %c0_i32, %arg1 : i32, i32
  }
  func.func @transform_2(%arg0: i32, %arg1: i32) -> (i32, i32) {
    %c0_i32 = arith.constant 0 : i32
    %c0_i32_0 = arith.constant 0 : i32
    %c0_i32_1 = arith.constant 0 : i32
    return %c0_i32, %c0_i32_0 : i32, i32
  }
  func.func @transform_3(%arg0: i32, %arg1: i32) -> (i32, i32) {
    %c0_i32 = arith.constant 0 : i32
    %c0_i32_0 = arith.constant 0 : i32
    %c0_i32_1 = arith.constant 0 : i32
    return %c0_i32, %c0_i32_0 : i32, i32
  }
  func.func @transform_4(%arg0: i32, %arg1: i32) -> (i32, i32) {
    %0 = arith.muli %arg1, %arg0 : i32
    %c0_i32 = arith.constant 0 : i32
    %c0_i32_0 = arith.constant 0 : i32
    return %c0_i32, %0 : i32, i32
  }
}

</mosaic_0001>

<llo_original>
// kernel: tpu_custom_call.1
$region0: #{tpu_custom_call.1}
  #allocation0 [shape = 'u32[]', space=smem, size = 0x4, offset = 0x4, fixed_abs, tag = 'smem constant byte address 0x4 - core index']
  #allocation1 [shape = 'u32[144,128]{1,0:T(1,128)}', space=vmem, size = 0x12000, scoped, tag = 'internal scratch']
  #allocation2 [shape = 'f32[8,1]{1,0:T(8,128)}', space=vmem, size = 0x1000, scoped, tag = 'scratch operand']
  #allocation3 [shape = 'f32[8,1]{1,0:T(8,128)}', space=vmem, size = 0x1000, scoped, tag = 'scratch operand']
  %s0 = inlined_call_operand.vmem [shape: f32[8,40], index: 0, kind: input, shape index: {}]
  %s1 = inlined_call_operand.hbm [shape: f32[40,512], index: 1, kind: input, shape index: {}]
  %s2 = inlined_call_operand.vmem [shape: f32[8,1], index: 2, kind: input, shape index: {}]
  %s3 = inlined_call_operand.vmem [shape: f32[8,1], index: 3, kind: input, shape index: {}]
  %s4 = inlined_call_operand.hbm [shape: f32[8,512], index: 4, kind: output, shape index: {}]
  %s5 = sld [smem:[#allocation0]]
  $region69: #{tpu_custom_call.1} parent=0
    _
  %s7 = ssub.s32 1, %s5
  %s8 = scalar_select 0, %s7, %s5
  $region1: #{tpu_custom_call.1} parent=0
    #allocation4 [shape = 'u8[81920]{0}', space=vmem, size = 0x14000, scoped, tag = 'input window, operand 1, single buffered']
    #allocation5 [shape = 's32[2]{0}', space=sflag, size = 0x8, scoped, tag = 'scoped memory for tpu_custom_call.1']
    #allocation6 [shape = 's32[2]{0}', space=sflag, size = 0x8, scoped, tag = 'scoped memory for tpu_custom_call.1']
    #allocation7 [shape = 'u8[32768]{0}', space=vmem, size = 0x8000, scoped, tag = 'output window, operand 0']
    %9 = vsyncpa [#allocation5], 0
    %10 = vsyncpa [#allocation6], 0
    %s11 = scalar_lea.sflag [#allocation6], 1
    %12 = vsyncpa %s11, 0
    loop: start=0, step=1, limit=4
    $region2: #{tpu_custom_call.1} parent=1 // loop_pre_header
      _
    $region3: #{tpu_custom_call.1} parent=1 // loop_header
      %s14 = sphi 0, %s18
      %p15 = scmp.ge.s32.totalorder %s14, 4
      %s21 = sphi 0, %s33
      %s22 = sphi 0, %s29
      %s23 = sphi 0, %s21
      %s24 = sphi 0, %s22
      %s25 = sphi 0, %s23
      %s26 = sphi 0, %s24
      %s34 = sphi 0, %s34
      %s36 = sphi 0, %s34
      %s37 = sphi 0, %s36
      %s51 = sphi 0, %s37
      %s57 = sphi 0, %s59
      %s60 = sphi 0, %s57
      %s61 = sphi 0, %s60
      %s77 = sphi 0, %s61
      %s81 = sphi 0, %s81
      %s83 = sphi 0, %s81
      %s84 = sphi 0, %s83
      %s98 = sphi 0, %s84
      %s102 = sphi 0, %s102
      %s104 = sphi 0, %s102
      %s105 = sphi 0, %s104
      %s119 = sphi 0, %s105
      %s127 = sphi 0, %s129
      %s130 = sphi 0, %s127
      %s131 = sphi 0, %s130
      %s147 = sphi 0, %s131
    $region4: #{tpu_custom_call.1} parent=1 // loop_header_branch
      %17 = sbr.rel (%p15) target = $region8
    $region5: #{tpu_custom_call.1} parent=1 // loop_body
      %s19 = ssub.s32 %s14, 1
      %s20 = ssub.s32 %s14, 2
      %s27 = sadd.s32 1, %s22
      %p28 = scmp.ge.s32.totalorder %s27, 1
      %s29 = scalar_select %p28, 0, %s27
      %s30 = sadd.s32 1, %s21
      %s31 = scalar_select %p28, %s30, %s21
      %p32 = scmp.ge.s32.totalorder %s31, 2
      %s33 = scalar_select %p32, 0, %s31
      %s35 = sadd.s32 %s34, 1
      %p38 = scmp.eq.s32.totalorder %s14, 1
      %p39 = scmp.ne.s32.totalorder %s34, %s36
      %p40 = scmp.eq.s32.totalorder %s14, 0
      %p41 = por %p39, %p40
      %p42 = scmp.ne.s32.totalorder %s34, %s36
      %p43 = scmp.eq.s32.totalorder %s19, 1
      %p44 = por %p42, %p43
      %p45 = scmp.ne.s32.totalorder %s36, %s37
      %p46 = scmp.eq.s32.totalorder %s19, 0
      %p47 = por %p45, %p46
      %p48 = scmp.ne.s32.totalorder %s36, %s37
      %p49 = scmp.eq.s32.totalorder %s20, 1
      %p50 = por %p48, %p49
      %p52 = scmp.ne.s32.totalorder %s37, %s51
      %p53 = scmp.eq.s32.totalorder %s20, 0
      %p54 = por %p52, %p53
      %s55 = ssub.s32 %s22, %s29
      %p56 = scmp.eq.s32.totalorder %s55, 0
      %s58 = sadd.s32 %s57, 1
      %s59 = scalar_select %p56, %s57, %s58
      %p62 = pneg %p56
      %p63 = scmp.eq.s32.totalorder %s14, 1
      %p64 = por %p62, %p63
      %p65 = scmp.ne.s32.totalorder %s57, %s60
      %p66 = scmp.eq.s32.totalorder %s14, 0
      %p67 = por %p65, %p66
      %p68 = scmp.ne.s32.totalorder %s57, %s60
      %p69 = scmp.eq.s32.totalorder %s19, 1
      %p70 = por %p68, %p69
      %p71 = scmp.ne.s32.totalorder %s60, %s61
      %p72 = scmp.eq.s32.totalorder %s19, 0
      %p73 = por %p71, %p72
      %p74 = scmp.ne.s32.totalorder %s60, %s61
      %p75 = scmp.eq.s32.totalorder %s20, 1
      %p76 = por %p74, %p75
      %p78 = scmp.ne.s32.totalorder %s61, %s77
      %p79 = scmp.eq.s32.totalorder %s20, 0
      %p80 = por %p78, %p79
      %s82 = sadd.s32 %s81, 1
      %p85 = scmp.eq.s32.totalorder %s14, 1
      %p86 = scmp.ne.s32.totalorder %s81, %s83
      %p87 = scmp.eq.s32.totalorder %s14, 0
      %p88 = por %p86, %p87
      %p89 = scmp.ne.s32.totalorder %s81, %s83
      %p90 = scmp.eq.s32.totalorder %s19, 1
      %p91 = por %p89, %p90
      %p92 = scmp.ne.s32.totalorder %s83, %s84
      %p93 = scmp.eq.s32.totalorder %s19, 0
      %p94 = por %p92, %p93
      %p95 = scmp.ne.s32.totalorder %s83, %s84
      %p96 = scmp.eq.s32.totalorder %s20, 1
      %p97 = por %p95, %p96
      %p99 = scmp.ne.s32.totalorder %s84, %s98
      %p100 = scmp.eq.s32.totalorder %s20, 0
      %p101 = por %p99, %p100
      %s103 = sadd.s32 %s102, 1
      %p106 = scmp.eq.s32.totalorder %s14, 1
      %p107 = scmp.ne.s32.totalorder %s102, %s104
      %p108 = scmp.eq.s32.totalorder %s14, 0
      %p109 = por %p107, %p108
      %p110 = scmp.ne.s32.totalorder %s102, %s104
      %p111 = scmp.eq.s32.totalorder %s19, 1
      %p112 = por %p110, %p111
      %p113 = scmp.ne.s32.totalorder %s104, %s105
      %p114 = scmp.eq.s32.totalorder %s19, 0
      %p115 = por %p113, %p114
      %p116 = scmp.ne.s32.totalorder %s104, %s105
      %p117 = scmp.eq.s32.totalorder %s20, 1
      %p118 = por %p116, %p117
      %p120 = scmp.ne.s32.totalorder %s105, %s119
      %p121 = scmp.eq.s32.totalorder %s20, 0
      %p122 = por %p120, %p121
      %s123 = smul.u32 %s22, %s21
      %s124 = smul.u32 %s29, %s33
      %s125 = ssub.s32 %s123, %s124
      %p126 = scmp.eq.s32.totalorder %s125, 0
      %s128 = sadd.s32 %s127, 1
      %s129 = scalar_select %p126, %s127, %s128
      %p132 = pneg %p126
      %p133 = scmp.eq.s32.totalorder %s14, 1
      %p134 = por %p132, %p133
      %p135 = scmp.ne.s32.totalorder %s127, %s130
      %p136 = scmp.eq.s32.totalorder %s14, 0
      %p137 = por %p135, %p136
      %p138 = scmp.ne.s32.totalorder %s127, %s130
      %p139 = scmp.eq.s32.totalorder %s19, 1
      %p140 = por %p138, %p139
      %p141 = scmp.ne.s32.totalorder %s130, %s131
      %p142 = scmp.eq.s32.totalorder %s19, 0
      %p143 = por %p141, %p142
      %p144 = scmp.ne.s32.totalorder %s130, %s131
      %p145 = scmp.eq.s32.totalorder %s20, 1
      %p146 = por %p144, %p145
      %p148 = scmp.ne.s32.totalorder %s131, %s147
      %p149 = scmp.eq.s32.totalorder %s20, 0
      %p150 = por %p148, %p149
      %p151 = scmp.le.s32.totalorder 1, %s14
      %p152 = scmp.lt.s32.totalorder %s14, 3
      %p153 = pnand %p151, %p152
      %p154 = pneg %p153
      // Predicated region
      $region9: #{tpu_custom_call.1} parent=5 // pred_check
        _
      $region10: #{tpu_custom_call.1} parent=5 // pred_check_branch
        %156 = sbr.rel (%p153) target = $region12
      $region11: #{tpu_custom_call.1} parent=5 // pred_region
        %s157 = ssub.s32 %s14, 1
        // Predicated region
        $region13: #{tpu_custom_call.1} parent=11 // pred_check
          %p158 = pneg %p47
        $region14: #{tpu_custom_call.1} parent=11 // pred_check_branch
          %160 = sbr.rel (%p158) target = $region16
        $region15: #{tpu_custom_call.1} parent=11 // pred_region
          _
        $region16: #{tpu_custom_call.1} parent=11 // pred_fallthru
          _
        // Predicated region
        $region17: #{tpu_custom_call.1} parent=11 // pred_check
          %p161 = pneg %p73
        $region18: #{tpu_custom_call.1} parent=11 // pred_check_branch
          %163 = sbr.rel (%p161) target = $region20
        $region19: #{tpu_custom_call.1} parent=11 // pred_region
          %s164 = smul.u32 4, %s24
          %s166 = ssub.s32 2560, 2560
          %167 = vsyncadd [#allocation5], %s166
          %s168 = smul.addr %s164, 128
          %s169 = scalar_lea.hbm %s1, %s168
          %s170 = sshll.u32 [#allocation4], 4
          %s171 = int_to_ptr.vmem [resolvable:$true] %s170
          %176 = dma.hbm_to_vmem [thread:$0]  %s169, 2560, %s171, [#allocation5], 512, 512, 32
        $region20: #{tpu_custom_call.1} parent=11 // pred_fallthru
          _
        // Predicated region
        $region21: #{tpu_custom_call.1} parent=11 // pred_check
          %p177 = pneg %p94
        $region22: #{tpu_custom_call.1} parent=11 // pred_check_branch
          %179 = sbr.rel (%p177) target = $region24
        $region23: #{tpu_custom_call.1} parent=11 // pred_region
          _
        $region24: #{tpu_custom_call.1} parent=11 // pred_fallthru
          _
        // Predicated region
        $region25: #{tpu_custom_call.1} parent=11 // pred_check
          %p180 = pneg %p115
        $region26: #{tpu_custom_call.1} parent=11 // pred_check_branch
          %182 = sbr.rel (%p180) target = $region28
        $region27: #{tpu_custom_call.1} parent=11 // pred_region
          _
        $region28: #{tpu_custom_call.1} parent=11 // pred_fallthru
          _
      $region12: #{tpu_custom_call.1} parent=5 // pred_fallthru
        _
      %p183 = scmp.lt.s32.totalorder %s14, 2
      // Predicated region
      $region29: #{tpu_custom_call.1} parent=5 // pred_check
        %p184 = pneg %p183
      $region30: #{tpu_custom_call.1} parent=5 // pred_check_branch
        %186 = sbr.rel (%p184) target = $region32
      $region31: #{tpu_custom_call.1} parent=5 // pred_region
        _
      $region32: #{tpu_custom_call.1} parent=5 // pred_fallthru
        _
      %p187 = scmp.le.s32.totalorder 1, %s14
      %p188 = scmp.lt.s32.totalorder %s14, 3
      %p189 = pnand %p187, %p188
      %p190 = pneg %p189
      // Predicated region
      $region33: #{tpu_custom_call.1} parent=5 // pred_check
        _
      $region34: #{tpu_custom_call.1} parent=5 // pred_check_branch
        %192 = sbr.rel (%p189) target = $region36
      $region35: #{tpu_custom_call.1} parent=5 // pred_region
        %s193 = ssub.s32 %s14, 1
        // Predicated region
        $region37: #{tpu_custom_call.1} parent=35 // pred_check
          %p194 = pneg %p73
        $region38: #{tpu_custom_call.1} parent=35 // pred_check_branch
          %196 = sbr.rel (%p194) target = $region40
        $region39: #{tpu_custom_call.1} parent=35 // pred_region
          %197 = dma.done [#allocation5], 2560
        $region40: #{tpu_custom_call.1} parent=35 // pred_fallthru
          _
        %p198 = pneg %p47
        %p199 = pneg %p44
        %p200 = pneg %p73
        %p201 = pneg %p70
        %p202 = pneg %p94
        %p203 = pneg %p91
        %p204 = pneg %p115
        %p205 = pneg %p112
        %p206 = pneg %p143
        %p207 = pneg %p140
        %s208 = sand.u32 %s130, 1
        %s209 = scalar_lea.sflag [#allocation6], %s208
        %s210 = sand.u32 %s130, 1
        %s211 = smul.addr %s210, 32
        %s212 = scalar_lea.vmem [#allocation7], %s211
        %s213 = smul.u32 4, %s24
        %s214 = smul.u32 %s24, %s23
        %s215 = smul.u32 4, %s214
        %p216 = scmp.eq.s32.totalorder %s23, 0
        %p217 = scmp.eq.s32.totalorder %s24, 0
        %p218 = pnand %p216, %p217
        %p219 = pneg %p218
        // Predicated region
        $region41: #{tpu_custom_call.1} parent=35 // pred_check
          _
        $region42: #{tpu_custom_call.1} parent=35 // pred_check_branch
          %221 = sbr.rel (%p218) target = $region44
        $region43: #{tpu_custom_call.1} parent=35 // pred_region
          %vm222 = vcmask 7168
          %223 = vst.msk [vmem:[#allocation2] sm:$0xff] %vm222, 0.0
          %224 = vst.msk [vmem:[#allocation3] sm:$0xff] %vm222, 0.0
        $region44: #{tpu_custom_call.1} parent=35 // pred_fallthru
          _
        %v225 = vld [vmem:[%s0] sm:$0xff]
        %v226 = vld [vmem:[#allocation4] sm:$0xff]
        %v227 = vld [vmem:[#allocation4 + $0x8] sm:$0xff]
        %v228 = vld [vmem:[#allocation4 + $0x10] sm:$0xff]
        %v229 = vld [vmem:[#allocation4 + $0x18] sm:$0xff]
        %v230 = vld [vmem:[#allocation4 + $0x20] sm:$0xff]
        %v231 = vld [vmem:[#allocation4 + $0x28] sm:$0xff]
        %v232 = vld [vmem:[#allocation4 + $0x30] sm:$0xff]
        %v233 = vld [vmem:[#allocation4 + $0x38] sm:$0xff]
        %v234 = vld [vmem:[#allocation4 + $0x40] sm:$0xff]
        %v235 = vld [vmem:[#allocation4 + $0x48] sm:$0xff]
        %v236 = vld [vmem:[#allocation4 + $0x50] sm:$0xff]
        %v237 = vld [vmem:[#allocation4 + $0x58] sm:$0xff]
        %v238 = vld [vmem:[#allocation4 + $0x60] sm:$0xff]
        %v239 = vld [vmem:[#allocation4 + $0x68] sm:$0xff]
        %v240 = vld [vmem:[#allocation4 + $0x70] sm:$0xff]
        %v241 = vld [vmem:[#allocation4 + $0x78] sm:$0xff]
        %v242 = vld [vmem:[#allocation4 + $0x80] sm:$0xff]
        %v243 = vld [vmem:[#allocation4 + $0x88] sm:$0xff]
        %v244 = vld [vmem:[#allocation4 + $0x90] sm:$0xff]
        %v245 = vld [vmem:[#allocation4 + $0x98] sm:$0xff]
        %vm246 = vcmask 326656
        %v248 = vsel %vm246, %v225, 0
        %250 = vmatprep.subr.mxu0 0.0
        %251 = vmatpush1.msra.mxu0 0.0
        %252 = vmatprep.subr.mxu0 0.0
        %253 = vmatpush1.msra.mxu0 0.0
        %254 = vmatprep.subr.mxu0 0.0
        %255 = vmatpush1.msra.mxu0 0.0
        %256 = vmatprep.subr.mxu0 0.0
        %257 = vmatpush1.msra.mxu0 0.0
        %258 = vmatprep.subr.mxu0 0.0
        %259 = vmatpush1.msra.mxu0 0.0
        %260 = vmatprep.subr.mxu0 0.0
        %261 = vmatpush1.msra.mxu0 0.0
        %262 = vmatprep.subr.mxu0 0.0
        %263 = vmatpush1.msra.mxu0 0.0
        %264 = vmatprep.subr.mxu0 0.0
        %265 = vmatpush1.msra.mxu0 0.0
        %266 = vmatprep.subr.mxu0 0.0
        %267 = vmatpush1.msra.mxu0 0.0
        %268 = vmatprep.subr.mxu0 0.0
        %269 = vmatpush1.msra.mxu0 0.0
        %270 = vmatprep.subr.mxu0 0.0
        %271 = vmatpush1.msra.mxu0 0.0
        %272 = vmatprep.subr.mxu0 %v243
        %273 = vmatpush1.msra.mxu0 %v242
        %274 = vmatprep.subr.mxu0 %v239
        %275 = vmatpush1.msra.mxu0 %v238
        %276 = vmatprep.subr.mxu0 %v235
        %277 = vmatpush1.msra.mxu0 %v234
        %278 = vmatprep.subr.mxu0 %v231
        %279 = vmatpush1.msra.mxu0 %v230
        %280 = vmatprep.subr.mxu0 %v227
        %281 = vmatpush1.msra.mxu0 %v226
        %282 = vmatprep.subr.mxu0 0.0
        %283 = vmatpush2.msra.mxu0 0.0
        %284 = vmatprep.subr.mxu0 0.0
        %285 = vmatpush2.msra.mxu0 0.0
        %286 = vmatprep.subr.mxu0 0.0
        %287 = vmatpush2.msra.mxu0 0.0
        %288 = vmatprep.subr.mxu0 0.0
        %289 = vmatpush2.msra.mxu0 0.0
        %290 = vmatprep.subr.mxu0 0.0
        %291 = vmatpush2.msra.mxu0 0.0
        %292 = vmatprep.subr.mxu0 0.0
        %293 = vmatpush2.msra.mxu0 0.0
        %294 = vmatprep.subr.mxu0 0.0
        %295 = vmatpush2.msra.mxu0 0.0
        %296 = vmatprep.subr.mxu0 0.0
        %297 = vmatpush2.msra.mxu0 0.0
        %298 = vmatprep.subr.mxu0 0.0
        %299 = vmatpush2.msra.mxu0 0.0
        %300 = vmatprep.subr.mxu0 0.0
        %301 = vmatpush2.msra.mxu0 0.0
        %302 = vmatprep.subr.mxu0 0.0
        %303 = vmatpush2.msra.mxu0 0.0
        %304 = vmatprep.subr.mxu0 0.0
        %305 = vmatpush2.msra.mxu0 0.0
        %306 = vmatprep.subr.mxu0 0.0
        %307 = vmatpush2.msra.mxu0 0.0
        %308 = vmatprep.subr.mxu0 0.0
        %309 = vmatpush2.msra.mxu0 0.0
        %310 = vmatprep.subr.mxu0 0.0
        %311 = vmatpush2.msra.mxu0 0.0
        %312 = vmatprep.subr.mxu0 0.0
        %313 = vmatpush2.msra.mxu0 0.0
        %314 = vmatprep.mubr.f32.mxu0 0.0
        %315 = vmatmul.mubr.f32.gmra.mxu0 %v248
        %v316 = vpop.f32.mrf.mxu0
        %v317 = vadd.f32 0.0, %v316
        %v318 = vpop.f32.mrf.mxu0
        %v319 = vadd.f32 0.0, %v318
        %320 = vdwg.mxu0
        %321 = vmatprep.subr.mxu0 0.0
        %322 = vmatpush1.msra.mxu0 0.0
        %323 = vmatprep.subr.mxu0 0.0
        %324 = vmatpush1.msra.mxu0 0.0
        %325 = vmatprep.subr.mxu0 0.0
        %326 = vmatpush1.msra.mxu0 0.0
        %327 = vmatprep.subr.mxu0 0.0
        %328 = vmatpush1.msra.mxu0 0.0
        %329 = vmatprep.subr.mxu0 0.0
        %330 = vmatpush1.msra.mxu0 0.0
        %331 = vmatprep.subr.mxu0 0.0
        %332 = vmatpush1.msra.mxu0 0.0
        %333 = vmatprep.subr.mxu0 0.0
        %334 = vmatpush1.msra.mxu0 0.0
        %335 = vmatprep.subr.mxu0 0.0
        %336 = vmatpush1.msra.mxu0 0.0
        %337 = vmatprep.subr.mxu0 0.0
        %338 = vmatpush1.msra.mxu0 0.0
        %339 = vmatprep.subr.mxu0 0.0
        %340 = vmatpush1.msra.mxu0 0.0
        %341 = vmatprep.subr.mxu0 0.0
        %342 = vmatpush1.msra.mxu0 0.0
        %343 = vmatprep.subr.mxu0 %v245
        %344 = vmatpush1.msra.mxu0 %v244
        %345 = vmatprep.subr.mxu0 %v241
        %346 = vmatpush1.msra.mxu0 %v240
        %347 = vmatprep.subr.mxu0 %v237
        %348 = vmatpush1.msra.mxu0 %v236
        %349 = vmatprep.subr.mxu0 %v233
        %350 = vmatpush1.msra.mxu0 %v232
        %351 = vmatprep.subr.mxu0 %v229
        %352 = vmatpush1.msra.mxu0 %v228
        %353 = vmatprep.subr.mxu0 0.0
        %354 = vmatpush2.msra.mxu0 0.0
        %355 = vmatprep.subr.mxu0 0.0
        %356 = vmatpush2.msra.mxu0 0.0
        %357 = vmatprep.subr.mxu0 0.0
        %358 = vmatpush2.msra.mxu0 0.0
        %359 = vmatprep.subr.mxu0 0.0
        %360 = vmatpush2.msra.mxu0 0.0
        %361 = vmatprep.subr.mxu0 0.0
        %362 = vmatpush2.msra.mxu0 0.0
        %363 = vmatprep.subr.mxu0 0.0
        %364 = vmatpush2.msra.mxu0 0.0
        %365 = vmatprep.subr.mxu0 0.0
        %366 = vmatpush2.msra.mxu0 0.0
        %367 = vmatprep.subr.mxu0 0.0
        %368 = vmatpush2.msra.mxu0 0.0
        %369 = vmatprep.subr.mxu0 0.0
        %370 = vmatpush2.msra.mxu0 0.0
        %371 = vmatprep.subr.mxu0 0.0
        %372 = vmatpush2.msra.mxu0 0.0
        %373 = vmatprep.subr.mxu0 0.0
        %374 = vmatpush2.msra.mxu0 0.0
        %375 = vmatprep.subr.mxu0 0.0
        %376 = vmatpush2.msra.mxu0 0.0
        %377 = vmatprep.subr.mxu0 0.0
        %378 = vmatpush2.msra.mxu0 0.0
        %379 = vmatprep.subr.mxu0 0.0
        %380 = vmatpush2.msra.mxu0 0.0
        %381 = vmatprep.subr.mxu0 0.0
        %382 = vmatpush2.msra.mxu0 0.0
        %383 = vmatprep.subr.mxu0 0.0
        %384 = vmatpush2.msra.mxu0 0.0
        %385 = vmatprep.mubr.f32.mxu0 0.0
        %386 = vmatmul.mubr.f32.gmra.mxu0 %v248
        %v387 = vpop.f32.mrf.mxu0
        %v388 = vadd.f32 0.0, %v387
        %v389 = vpop.f32.mrf.mxu0
        %v390 = vadd.f32 0.0, %v389
        %391 = vdwg.mxu0
        // Predicated region
        $region45: #{tpu_custom_call.1} parent=35 // pred_check
          %p392 = pneg %p216
        $region46: #{tpu_custom_call.1} parent=35 // pred_check_branch
          %394 = sbr.rel (%p392) target = $region48
        $region47: #{tpu_custom_call.1} parent=35 // pred_region
          %v395 = vld [vmem:[#allocation2] sm:$0xff]
          %v396 = vadd.f32 %v317, %v319
          %v397 = vadd.f32 %v396, %v388
          %v398 = vadd.f32 %v397, %v390
          %399 = vadd.xlane.f32.xlu0 %v398
          %v400 = vpop.xlane.xlu0 %399
          %v401 = vadd.f32 %v395, %v400
          %vm402 = vcmask 7168
          %403 = vst.msk [vmem:[#allocation2] sm:$0xff] %vm402, %v401
          %v404 = vld [vmem:[#allocation3] sm:$0xff]
          %v405 = vmul.f32 %v317, %v317
          %v406 = vmul.f32 %v319, %v319
          %v407 = vmul.f32 %v388, %v388
          %v408 = vmul.f32 %v390, %v390
          %v409 = vadd.f32 %v405, %v406
          %v410 = vadd.f32 %v409, %v407
          %v411 = vadd.f32 %v410, %v408
          %412 = vadd.xlane.f32.xlu0 %v411
          %v413 = vpop.xlane.xlu0 %412
          %v414 = vadd.f32 %v404, %v413
          %415 = vst.msk [vmem:[#allocation3] sm:$0xff] %vm402, %v414
        $region48: #{tpu_custom_call.1} parent=35 // pred_fallthru
          _
        // Predicated region
        $region49: #{tpu_custom_call.1} parent=35 // pred_check
          _
        $region50: #{tpu_custom_call.1} parent=35 // pred_check_branch
          %417 = sbr.rel (%p218) target = $region52
        $region51: #{tpu_custom_call.1} parent=35 // pred_region
          %v418 = vld [vmem:[#allocation2] sm:$0xff]
          %v419 = vmul.f32 %v418, 0.001953125
          %v420 = vld [vmem:[#allocation3] sm:$0xff]
          %v421 = vmul.f32 %v420, 0.001953125
          %v422 = vmul.f32 %v419, %v419
          %v423 = vsub.f32 %v421, %v422
          %v424 = vmax.f32 %v423, 0.0
          %v425 = vadd.f32 %v424, 1e-05
          %v426 = vrsqrt.pop %v425
          %v427 = vld [vmem:[%s2] sm:$0xff]
          %v428 = vmul.f32 %v427, %v426
          %v429 = vld [vmem:[%s3] sm:$0xff]
          %v430 = vmul.f32 %v419, %v428
          %v431 = vsub.f32 %v429, %v430
          %vm432 = vcmask 7168
          %433 = vst.msk [vmem:[#allocation2] sm:$0xff] %vm432, %v428
          %434 = vst.msk [vmem:[#allocation3] sm:$0xff] %vm432, %v431
        $region52: #{tpu_custom_call.1} parent=35 // pred_fallthru
          _
        %p435 = scmp.eq.s32.totalorder %s23, 1
        // Predicated region
        $region53: #{tpu_custom_call.1} parent=35 // pred_check
          %p436 = pneg %p435
        $region54: #{tpu_custom_call.1} parent=35 // pred_check_branch
          %438 = sbr.rel (%p436) target = $region56
        $region55: #{tpu_custom_call.1} parent=35 // pred_region
          %v439 = vld [vmem:[#allocation2] sm:$0xff]
          %441 = vset.pattern.permute.xlu0 0
          %442 = vperm.xlu0 %441, %v439
          %v443 = vpop.permute.xlu0 %442
          %v445 = vmul.f32 %v317, %v443
          %v446 = vmul.f32 %v319, %v443
          %v447 = vmul.f32 %v388, %v443
          %v448 = vmul.f32 %v390, %v443
          %v449 = vld [vmem:[#allocation3] sm:$0xff]
          %451 = vset.pattern.permute.xlu0 0
          %452 = vperm.xlu0 %451, %v449
          %v453 = vpop.permute.xlu0 %452
          %v455 = vadd.f32 %v445, %v453
          %v456 = vadd.f32 %v446, %v453
          %v457 = vadd.f32 %v447, %v453
          %v458 = vadd.f32 %v448, %v453
          %459 = vst [vmem:[%s212] sm:$0xff] %v455
          %460 = vst [vmem:[%s212 + $0x8] sm:$0xff] %v456
          %461 = vst [vmem:[%s212 + $0x10] sm:$0xff] %v457
          %462 = vst [vmem:[%s212 + $0x18] sm:$0xff] %v458
        $region56: #{tpu_custom_call.1} parent=35 // pred_fallthru
          _
        %s463 = sand.u32 %s130, 1
        %s464 = scalar_lea.sflag [#allocation6], %s463
        %s465 = sand.u32 %s130, 1
        %s466 = smul.addr %s465, 32
        %s467 = scalar_lea.vmem [#allocation7], %s466
        // Predicated region
        $region57: #{tpu_custom_call.1} parent=35 // pred_check
          %p468 = pneg %p140
        $region58: #{tpu_custom_call.1} parent=35 // pred_check_branch
          %470 = sbr.rel (%p468) target = $region60
        $region59: #{tpu_custom_call.1} parent=35 // pred_region
          %s471 = smul.u32 %s24, %s23
          %s472 = smul.u32 4, %s471
          %s474 = ssub.s32 512, 512
          %475 = vsyncadd %s464, %s474
          %s476 = smul.addr %s472, 128
          %s477 = scalar_lea.hbm %s4, %s476
          %s479 = sshll.u32 %s467, 4
          %s480 = int_to_ptr.vmem [resolvable:$true] %s479
          %482 = dma.vmem_to_hbm [thread:$0]  %s480, 512, %s477, %s464
        $region60: #{tpu_custom_call.1} parent=35 // pred_fallthru
          _
      $region36: #{tpu_custom_call.1} parent=5 // pred_fallthru
        _
      %p483 = scmp.le.s32.totalorder 2, %s14
      // Predicated region
      $region61: #{tpu_custom_call.1} parent=5 // pred_check
        %p484 = pneg %p483
      $region62: #{tpu_custom_call.1} parent=5 // pred_check_branch
        %486 = sbr.rel (%p484) target = $region64
      $region63: #{tpu_custom_call.1} parent=5 // pred_region
        %s487 = ssub.s32 %s14, 2
        // Predicated region
        $region65: #{tpu_custom_call.1} parent=63 // pred_check
          %p488 = pneg %p146
        $region66: #{tpu_custom_call.1} parent=63 // pred_check_branch
          %490 = sbr.rel (%p488) target = $region68
        $region67: #{tpu_custom_call.1} parent=63 // pred_region
          %s491 = sand.u32 %s131, 1
          %s492 = scalar_lea.sflag [#allocation6], %s491
          %s493 = sand.u32 %s131, 1
          %s494 = smul.addr %s493, 32
          %s495 = scalar_lea.vmem [#allocation7], %s494
          %496 = dma.done %s492, 512
        $region68: #{tpu_custom_call.1} parent=63 // pred_fallthru
          _
      $region64: #{tpu_custom_call.1} parent=5 // pred_fallthru
        _
    $region6: #{tpu_custom_call.1} parent=1 // loop_footer
      %s18 = sadd.s32 1, %s14
    $region7: #{tpu_custom_call.1} parent=1 // loop_footer_branch
      %13 = sbr.rel target = $region3
    $region8: #{tpu_custom_call.1} parent=1 // loop_exit
      _
    %497 = vsyncpa [#allocation5], 1
    %s498 = scalar_lea.sflag [#allocation5], 1
    %499 = vsyncpa %s498, 1
    %500 = vsyncpa [#allocation6], 1
    %s501 = scalar_lea.sflag [#allocation6], 1
    %502 = vsyncpa %s501, 1

</llo_original>
